<compile_context>
chip_gen: v7x
topology: tpu7x:2x2x1
jax: 0.10.0
libtpu: 0.0.40
codegen_flags: <defaults>
</compile_context>

<pallas_src>
import functools

import jax
import jax.numpy as jnp
from jax import lax
from jax.experimental import pallas as pl
from jax.experimental.pallas import tpu as pltpu


def _window_attention_kernel(h_ref, w_ref, b_ref, sents_ref, kprev_ref,
                             u_ref, prefix_ref, bsel_ref, blkmask_ref,
                             kap_out_ref, wt_out_ref, kcarry_ref,
                             *, num_k, t_blk, n_b):
    """One time-chunk (T_BLK steps x B batch) of the soft-window attention.

    Row index r of every 2-D slab is r = t * B + b  (t-major, b-minor).
    """
    c = pl.program_id(0)

    # Initialize the carried kappa state from kappa_prev on the first chunk.
    @pl.when(c == 0)
    def _():
        kcarry_ref[...] = kprev_ref[...]

    # ---- chunk-wide linear projection: one MXU matmul instead of T tiny ones ----
    p = jnp.dot(h_ref[...], w_ref[...], preferred_element_type=jnp.float32)
    p = p + b_ref[...]                                          # (TB, 3K)

    a_hat = p[:, :num_k]                                        # stays in log space
    eb_ek = jnp.exp(p[:, num_k:])                               # one EUP pass (2K lanes)
    beta = eb_ek[:, :num_k]                                     # exp(b_hat)   (TB, K)
    exp_kap = eb_ek[:, num_k:]                                  # exp(kap_hat) (TB, K)

    # ---- kappa recurrence as a prefix sum -> two small MXU matmuls ----
    # prefix_ref[r, r'] = 1 iff same batch and t' <= t   (cumulative sum over time)
    # bsel_ref[r, b]    = 1 iff row r belongs to batch b (replicates the carry)
    kap = (jnp.dot(prefix_ref[...], exp_kap, preferred_element_type=jnp.float32)
           + jnp.dot(bsel_ref[...], kcarry_ref[...],
                     preferred_element_type=jnp.float32))       # (TB, K)
    kcarry_ref[...] = kap[(t_blk - 1) * n_b:t_blk * n_b, :]     # last step -> carry
    kap_out_ref[...] = kap                                      # one chunked store

    # ---- Gaussian window over the flattened (batch-block, char) lane axis ----
    # u_ref holds [1..U_pad, 1..U_pad, ...] (B blocks); cross-batch blocks are
    # zeroed below by blkmask.  exp(a)*exp(-beta d^2) == exp(a - beta d^2).
    diff = kap[:, :, None] - u_ref[...]                         # (TB, K, B*U_pad)
    phi = jnp.sum(jnp.exp(a_hat[:, :, None] - beta[:, :, None] * (diff * diff)),
                  axis=1)                                       # (TB, B*U_pad)
    phi = phi * blkmask_ref[...]                                # zero cross-batch blocks

    # ---- soft window vector: ONE lane-dense block-diagonal MXU matmul ----
    wt_out_ref[...] = jnp.dot(phi, sents_ref[...],
                              preferred_element_type=jnp.float32)   # (TB, V_pad)


def window_attention_seq(h_seq, weight, bias, sentences_oh, kappa_prev, sent_masks,
                         *, max_t_block=64):
    """Run soft-window attention for T recurrent steps with one fused kernel.

    h_seq: (T, B, fc_in).  Returns kappa_seq (T, B, K), w_t_seq (T, B, V).
    """
    T, B, fc_in = h_seq.shape
    U, V = sentences_oh.shape[1], sentences_oh.shape[2]
    fc_out = weight.shape[1]
    assert fc_out % 3 == 0
    num_k = fc_out // 3

    # T-blocking: one chunk for small T, otherwise 8-aligned chunks.
    t_blk = T if T <= max_t_block else max_t_block
    t_pad = -(-T // t_blk) * t_blk
    n_chunks = t_pad // t_blk
    tb = t_blk * B

    # Pad U to a sublane multiple and V to a lane multiple (lane-dense w_t store).
    u_pad = -(-U // 8) * 8
    v_pad = -(-V // 128) * 128

    # Fold sent_masks into the one-hot sentences (exact: both are 0/1), pad, and
    # flatten to (B*U_pad, V_pad) for the block-diagonal contraction.
    sents_flat = jnp.pad(sentences_oh * sent_masks[:, :, None],
                         ((0, 0), (0, u_pad - U), (0, v_pad - V))
                         ).reshape(B * u_pad, v_pad)

    # Static helper matrices (resident in VMEM across all chunks).
    t_idx = jnp.arange(tb) // B
    b_idx = jnp.arange(tb) % B
    prefix = ((b_idx[None, :] == b_idx[:, None])
              & (t_idx[None, :] <= t_idx[:, None])).astype(jnp.float32)   # (TB, TB)
    bsel = (b_idx[:, None] == jnp.arange(B)[None, :]).astype(jnp.float32)  # (TB, B)
    col_blk = jnp.arange(B * u_pad) // u_pad
    blkmask = (b_idx[:, None] == col_blk[None, :]).astype(jnp.float32)     # (TB, B*U_pad)
    u3d = jnp.tile(jnp.arange(1, u_pad + 1, dtype=jnp.float32),
                   (B,)).reshape(1, 1, B * u_pad)

    # Flatten h to 2-D rows (t*B + b) so the kernel needs no reshapes.
    h_flat = jnp.pad(h_seq, ((0, t_pad - T), (0, 0), (0, 0))).reshape(t_pad * B, fc_in)
    bias2d = bias.reshape(1, fc_out)

    kernel = functools.partial(_window_attention_kernel, num_k=num_k,
                               t_blk=t_blk, n_b=B)

    kappa2d, wt2d = pl.pallas_call(
        kernel,
        out_shape=(
            jax.ShapeDtypeStruct((t_pad * B, num_k), jnp.float32),
            jax.ShapeDtypeStruct((t_pad * B, v_pad), jnp.float32),
        ),
        grid_spec=pltpu.PrefetchScalarGridSpec(
            num_scalar_prefetch=0,
            grid=(n_chunks,),
            in_specs=[
                pl.BlockSpec((tb, fc_in), lambda c: (c, 0)),          # h chunk
                pl.BlockSpec((fc_in, fc_out), lambda c: (0, 0)),      # weight (resident)
                pl.BlockSpec((1, fc_out), lambda c: (0, 0)),          # bias (resident)
                pl.BlockSpec((B * u_pad, v_pad), lambda c: (0, 0)),   # masked one-hot (resident)
                pl.BlockSpec((B, num_k), lambda c: (0, 0)),           # kappa_prev (resident)
                pl.BlockSpec((1, 1, B * u_pad), lambda c: (0, 0, 0)), # u values (resident)
                pl.BlockSpec((tb, tb), lambda c: (0, 0)),             # prefix-sum matrix
                pl.BlockSpec((tb, B), lambda c: (0, 0)),              # carry selector
                pl.BlockSpec((tb, B * u_pad), lambda c: (0, 0)),      # block-diag mask
            ],
            out_specs=(
                pl.BlockSpec((tb, num_k), lambda c: (c, 0)),          # kappa chunk
                pl.BlockSpec((tb, v_pad), lambda c: (c, 0)),          # w_t chunk (lane-dense)
            ),
            scratch_shapes=[pltpu.VMEM((B, num_k), jnp.float32)],     # kappa carry
        ),
        # Chunks are sequential (kappa carry crosses chunk boundaries).
        compiler_params=pltpu.CompilerParams(dimension_semantics=("arbitrary",)),
    )(h_flat, weight, bias2d, sents_flat, kappa_prev, u3d, prefix, bsel, blkmask)

    kappa_seq = kappa2d.reshape(t_pad, B, num_k)[:T]
    wt_seq = wt2d.reshape(t_pad, B, v_pad)[:T, :, :V]
    return kappa_seq, wt_seq


def window_attention(h1_out, weight, bias, sentences_oh, kappa_prev, sent_masks,
                     stroke_masks=None):
    """Single-step forward, matching the PyTorch module exactly (T = 1)."""
    del stroke_masks  # unused by the reference forward pass (signature parity)
    kappa_seq, wt_seq = window_attention_seq(h1_out[None], weight, bias,
                                             sentences_oh, kappa_prev, sent_masks)
    return kappa_seq[0], wt_seq[0]


# ----------------------------- pure-JAX reference -----------------------------
def _reference_step(h, weight, bias, sentences_oh, kappa_prev, sent_masks):
    p = h @ weight + bias
    num_k = p.shape[1] // 3
    a_hat, b_hat, kap_hat = p[:, :num_k], p[:, num_k:2 * num_k], p[:, 2 * num_k:]
    alpha, beta = jnp.exp(a_hat), jnp.exp(b_hat)
    kappa = kappa_prev + jnp.exp(kap_hat)
    U = sentences_oh.shape[1]
    u = jnp.arange(1, U + 1, dtype=jnp.float32)[None, None, :]
    exp_term = jnp.exp(-beta[:, :, None] * (kappa[:, :, None] - u) ** 2)
    phi = jnp.sum(alpha[:, :, None] * exp_term, axis=1) * sent_masks
    w_t = jnp.sum(phi[:, :, None] * sentences_oh, axis=1)
    return kappa, w_t


def _reference_seq(h_seq, weight, bias, sentences_oh, kappa0, sent_masks):
    kappa = kappa0
    kappas, wts = [], []
    for t in range(h_seq.shape[0]):
        kappa, w_t = _reference_step(h_seq[t], weight, bias, sentences_oh,
                                     kappa, sent_masks)
        kappas.append(kappa)
        wts.append(w_t)
    return jnp.stack(kappas), jnp.stack(wts)


if __name__ == "__main__":
    # Small, module-consistent shapes.
    B = 2            # batch
    FC_IN = 32       # fc_in_size (hidden size of h1_out)
    K = 8            # number of mixture components
    FC_OUT = 3 * K   # fc_out_size
    U = 16           # sentence length
    V = 64           # one-hot vocab size
    T = 8            # recurrent timesteps for the fused-sequence test

    key = jax.random.PRNGKey(0)
    k_h, k_w, k_b, k_s, k_kp, k_m = jax.random.split(key, 6)

    h_seq = jax.random.normal(k_h, (T, B, FC_IN), dtype=jnp.float32)
    # "PyTorch-Linear-like" params stored as (in, out) so the kernel does x @ W + b.
    weight = jax.random.normal(k_w, (FC_IN, FC_OUT), dtype=jnp.float32) * 0.1
    bias = jax.random.normal(k_b, (FC_OUT,), dtype=jnp.float32) * 0.1

    char_ids = jax.random.randint(k_s, (B, U), 0, V)
    sentences_oh = jax.nn.one_hot(char_ids, V, dtype=jnp.float32)             # (B, U, V)
    kappa_prev = jax.random.uniform(k_kp, (B, K), dtype=jnp.float32)          # (B, K)
    sent_masks = (jax.random.uniform(k_m, (B, U)) > 0.2).astype(jnp.float32)  # (B, U)
    stroke_masks = jnp.ones((B, 1), dtype=jnp.float32)  # unused, parity only

    # ---- single-step (exact module semantics) ----
    kappa1, wt1 = window_attention(h_seq[0], weight, bias, sentences_oh,
                                   kappa_prev, sent_masks, stroke_masks)
    jax.block_until_ready((kappa1, wt1))
    kappa1_ref, wt1_ref = _reference_step(h_seq[0], weight, bias, sentences_oh,
                                          kappa_prev, sent_masks)
    assert jnp.allclose(kappa1, kappa1_ref, atol=1e-4, rtol=1e-4)
    assert jnp.allclose(wt1, wt1_ref, atol=1e-4, rtol=1e-4)

    # ---- fused T-step recurrence (time-batched prefix-sum formulation) ----
    kappa_seq, wt_seq = window_attention_seq(h_seq, weight, bias, sentences_oh,
                                             kappa_prev, sent_masks)
    jax.block_until_ready((kappa_seq, wt_seq))
    kappa_seq_ref, wt_seq_ref = _reference_seq(h_seq, weight, bias, sentences_oh,
                                               kappa_prev, sent_masks)
    assert jnp.allclose(kappa_seq, kappa_seq_ref, atol=1e-4, rtol=1e-4)
    assert jnp.allclose(wt_seq, wt_seq_ref, atol=1e-4, rtol=1e-4)

    print("KERNEL_OK")
</pallas_src>

<mosaic_0001>
module attributes {stable_mosaic.version = 11 : i64} {
  func.func @_window_attention_kernel(%arg0: i32, %arg1: memref<2x32xf32, #tpu.memory_space<vmem>>, %arg2: memref<32x24xf32, #tpu.memory_space<vmem>>, %arg3: memref<1x24xf32, #tpu.memory_space<vmem>>, %arg4: memref<32x128xf32, #tpu.memory_space<vmem>>, %arg5: memref<2x8xf32, #tpu.memory_space<vmem>>, %arg6: memref<1x1x32xf32, #tpu.memory_space<vmem>>, %arg7: memref<2x2xf32, #tpu.memory_space<vmem>>, %arg8: memref<2x2xf32, #tpu.memory_space<vmem>>, %arg9: memref<2x32xf32, #tpu.memory_space<vmem>>, %arg10: memref<2x8xf32, #tpu.memory_space<vmem>>, %arg11: memref<2x128xf32, #tpu.memory_space<vmem>>, %arg12: memref<2x8xf32, #tpu.memory_space<vmem>>) attributes {dimension_semantics = [#tpu.dimension_semantics<arbitrary>], iteration_bounds = array<i64: 1>, scalar_prefetch = 0 : i64, scratch_operands = 1 : i64, tpu.core_type = #tpu.core_type<tc>, window_params = [{transform_indices = @transform_0, window_bounds = array<i64: 2, 32>}, {pipeline_mode = #tpu.pipeline_mode<synchronous>, transform_indices = @transform_1, window_bounds = array<i64: 32, 24>}, {pipeline_mode = #tpu.pipeline_mode<synchronous>, transform_indices = @transform_2, window_bounds = array<i64: 1, 24>}, {pipeline_mode = #tpu.pipeline_mode<synchronous>, transform_indices = @transform_3, window_bounds = array<i64: 32, 128>}, {pipeline_mode = #tpu.pipeline_mode<synchronous>, transform_indices = @transform_4, window_bounds = array<i64: 2, 8>}, {pipeline_mode = #tpu.pipeline_mode<synchronous>, transform_indices = @transform_5, window_bounds = array<i64: 1, 1, 32>}, {pipeline_mode = #tpu.pipeline_mode<synchronous>, transform_indices = @transform_6, window_bounds = array<i64: 2, 2>}, {pipeline_mode = #tpu.pipeline_mode<synchronous>, transform_indices = @transform_7, window_bounds = array<i64: 2, 2>}, {pipeline_mode = #tpu.pipeline_mode<synchronous>, transform_indices = @transform_8, window_bounds = array<i64: 2, 32>}, {transform_indices = @transform_9, window_bounds = array<i64: 2, 8>}, {transform_indices = @transform_10, window_bounds = array<i64: 2, 128>}]} {
    %c0_i32 = arith.constant 0 : i32
    %0 = arith.cmpi eq, %arg0, %c0_i32 : i32
    %1 = arith.extui %0 : i1 to i32
    %c0_i32_0 = arith.constant 0 : i32
    %2 = arith.cmpi ne, %1, %c0_i32_0 : i32
    scf.if %2 {
      %c0_29 = arith.constant 0 : index
      %c0_30 = arith.constant 0 : index
      %41 = vector.load %arg5[%c0_29, %c0_30] : memref<2x8xf32, #tpu.memory_space<vmem>>, vector<2x8xf32>
      %c0_31 = arith.constant 0 : index
      %c0_32 = arith.constant 0 : index
      %42 = vector.load %arg12[%c0_31, %c0_32] : memref<2x8xf32, #tpu.memory_space<vmem>>, vector<2x8xf32>
      tpu.vector_store %arg12[%c0_31, %c0_32], %41 {strides = array<i32>} : memref<2x8xf32, #tpu.memory_space<vmem>>, vector<2x8xf32>,
    } else {
    }
    %c0 = arith.constant 0 : index
    %c0_1 = arith.constant 0 : index
    %3 = vector.load %arg1[%c0, %c0_1] : memref<2x32xf32, #tpu.memory_space<vmem>>, vector<2x32xf32>
    %c0_2 = arith.constant 0 : index
    %c0_3 = arith.constant 0 : index
    %4 = vector.load %arg2[%c0_2, %c0_3] : memref<32x24xf32, #tpu.memory_space<vmem>>, vector<32x24xf32>
    %cst = arith.constant dense<0.000000e+00> : vector<2x24xf32>
    %5 = tpu.matmul %3, %4, %cst {dimension_numbers = #tpu.dot_dimension_numbers<[1], [0], [0], [1], [0, 0, 1, 1], [], []>} : vector<2x32xf32>, vector<32x24xf32>, vector<2x24xf32> -> vector<2x24xf32>
    %c0_4 = arith.constant 0 : index
    %c0_5 = arith.constant 0 : index
    %6 = vector.load %arg3[%c0_4, %c0_5] : memref<1x24xf32, #tpu.memory_space<vmem>>, vector<1x24xf32>
    %7 = vector.broadcast %6 : vector<1x24xf32> to vector<2x24xf32>
    %8 = arith.addf %5, %7 : vector<2x24xf32>
    %9 = vector.extract_strided_slice %8 {offsets = [0, 0], sizes = [2, 8], strides = [1, 1]} : vector<2x24xf32> to vector<2x8xf32>
    %10 = vector.extract_strided_slice %8 {offsets = [0, 8], sizes = [2, 16], strides = [1, 1]} : vector<2x24xf32> to vector<2x16xf32>
    %11 = math.exp %10 : vector<2x16xf32>
    %12 = vector.extract_strided_slice %11 {offsets = [0, 0], sizes = [2, 8], strides = [1, 1]} : vector<2x16xf32> to vector<2x8xf32>
    %13 = vector.extract_strided_slice %11 {offsets = [0, 8], sizes = [2, 8], strides = [1, 1]} : vector<2x16xf32> to vector<2x8xf32>
    %c0_6 = arith.constant 0 : index
    %c0_7 = arith.constant 0 : index
    %14 = vector.load %arg7[%c0_6, %c0_7] : memref<2x2xf32, #tpu.memory_space<vmem>>, vector<2x2xf32>
    %cst_8 = arith.constant dense<0.000000e+00> : vector<2x8xf32>
    %15 = tpu.matmul %14, %13, %cst_8 {dimension_numbers = #tpu.dot_dimension_numbers<[1], [0], [0], [1], [0, 0, 1, 1], [], []>} : vector<2x2xf32>, vector<2x8xf32>, vector<2x8xf32> -> vector<2x8xf32>
    %c0_9 = arith.constant 0 : index
    %c0_10 = arith.constant 0 : index
    %16 = vector.load %arg8[%c0_9, %c0_10] : memref<2x2xf32, #tpu.memory_space<vmem>>, vector<2x2xf32>
    %c0_11 = arith.constant 0 : index
    %c0_12 = arith.constant 0 : index
    %17 = vector.load %arg12[%c0_11, %c0_12] : memref<2x8xf32, #tpu.memory_space<vmem>>, vector<2x8xf32>
    %cst_13 = arith.constant dense<0.000000e+00> : vector<2x8xf32>
    %18 = tpu.matmul %16, %17, %cst_13 {dimension_numbers = #tpu.dot_dimension_numbers<[1], [0], [0], [1], [0, 0, 1, 1], [], []>} : vector<2x2xf32>, vector<2x8xf32>, vector<2x8xf32> -> vector<2x8xf32>
    %19 = arith.addf %15, %18 : vector<2x8xf32>
    %c0_14 = arith.constant 0 : index
    %c0_15 = arith.constant 0 : index
    %20 = vector.load %arg12[%c0_14, %c0_15] : memref<2x8xf32, #tpu.memory_space<vmem>>, vector<2x8xf32>
    tpu.vector_store %arg12[%c0_14, %c0_15], %19 {strides = array<i32>} : memref<2x8xf32, #tpu.memory_space<vmem>>, vector<2x8xf32>,
    %c0_16 = arith.constant 0 : index
    %c0_17 = arith.constant 0 : index
    %21 = vector.load %arg10[%c0_16, %c0_17] : memref<2x8xf32, #tpu.memory_space<vmem>>, vector<2x8xf32>
    tpu.vector_store %arg10[%c0_16, %c0_17], %19 {strides = array<i32>} : memref<2x8xf32, #tpu.memory_space<vmem>>, vector<2x8xf32>,
    %22 = vector.shape_cast %19 : vector<2x8xf32> to vector<2x8x1xf32>
    %c0_18 = arith.constant 0 : index
    %c0_19 = arith.constant 0 : index
    %c0_20 = arith.constant 0 : index
    %23 = vector.load %arg6[%c0_18, %c0_19, %c0_20] : memref<1x1x32xf32, #tpu.memory_space<vmem>>, vector<1x1x32xf32>
    %24 = vector.broadcast %22 : vector<2x8x1xf32> to vector<2x8x32xf32>
    %25 = vector.broadcast %23 : vector<1x1x32xf32> to vector<2x8x32xf32>
    %26 = arith.subf %24, %25 : vector<2x8x32xf32>
    %27 = vector.shape_cast %9 : vector<2x8xf32> to vector<2x8x1xf32>
    %28 = vector.shape_cast %12 : vector<2x8xf32> to vector<2x8x1xf32>
    %29 = arith.mulf %26, %26 : vector<2x8x32xf32>
    %30 = vector.broadcast %28 : vector<2x8x1xf32> to vector<2x8x32xf32>
    %31 = arith.mulf %30, %29 : vector<2x8x32xf32>
    %32 = vector.broadcast %27 : vector<2x8x1xf32> to vector<2x8x32xf32>
    %33 = arith.subf %32, %31 : vector<2x8x32xf32>
    %34 = math.exp %33 : vector<2x8x32xf32>
    %cst_21 = arith.constant dense<0.000000e+00> : vector<2x32xf32>
    %35 = vector.multi_reduction <add>, %34, %cst_21 [1] : vector<2x8x32xf32> to vector<2x32xf32>
    %c0_22 = arith.constant 0 : index
    %c0_23 = arith.constant 0 : index
    %36 = vector.load %arg9[%c0_22, %c0_23] : memref<2x32xf32, #tpu.memory_space<vmem>>, vector<2x32xf32>
    %37 = arith.mulf %35, %36 : vector<2x32xf32>
    %c0_24 = arith.constant 0 : index
    %c0_25 = arith.constant 0 : index
    %38 = vector.load %arg4[%c0_24, %c0_25] : memref<32x128xf32, #tpu.memory_space<vmem>>, vector<32x128xf32>
    %cst_26 = arith.constant dense<0.000000e+00> : vector<2x128xf32>
    %39 = tpu.matmul %37, %38, %cst_26 {dimension_numbers = #tpu.dot_dimension_numbers<[1], [0], [0], [1], [0, 0, 1, 1], [], []>} : vector<2x32xf32>, vector<32x128xf32>, vector<2x128xf32> -> vector<2x128xf32>
    %c0_27 = arith.constant 0 : index
    %c0_28 = arith.constant 0 : index
    %40 = vector.load %arg11[%c0_27, %c0_28] : memref<2x128xf32, #tpu.memory_space<vmem>>, vector<2x128xf32>
    tpu.vector_store %arg11[%c0_27, %c0_28], %39 {strides = array<i32>} : memref<2x128xf32, #tpu.memory_space<vmem>>, vector<2x128xf32>,
    return
  }
  func.func @transform_0(%arg0: i32) -> (i32, i32) {
    %c0_i32 = arith.constant 0 : i32
    %c0_i32_0 = arith.constant 0 : i32
    return %arg0, %c0_i32 : i32, i32
  }
  func.func @transform_1(%arg0: i32) -> (i32, i32) {
    %c0_i32 = arith.constant 0 : i32
    %c0_i32_0 = arith.constant 0 : i32
    %c0_i32_1 = arith.constant 0 : i32
    return %c0_i32, %c0_i32_0 : i32, i32
  }
  func.func @transform_2(%arg0: i32) -> (i32, i32) {
    %c0_i32 = arith.constant 0 : i32
    %c0_i32_0 = arith.constant 0 : i32
    %c0_i32_1 = arith.constant 0 : i32
    return %c0_i32, %c0_i32_0 : i32, i32
  }
  func.func @transform_3(%arg0: i32) -> (i32, i32) {
    %c0_i32 = arith.constant 0 : i32
    %c0_i32_0 = arith.constant 0 : i32
    %c0_i32_1 = arith.constant 0 : i32
    return %c0_i32, %c0_i32_0 : i32, i32
  }
  func.func @transform_4(%arg0: i32) -> (i32, i32) {
    %c0_i32 = arith.constant 0 : i32
    %c0_i32_0 = arith.constant 0 : i32
    %c0_i32_1 = arith.constant 0 : i32
    return %c0_i32, %c0_i32_0 : i32, i32
  }
  func.func @transform_5(%arg0: i32) -> (i32, i32, i32) {
    %c0_i32 = arith.constant 0 : i32
    %c0_i32_0 = arith.constant 0 : i32
    %c0_i32_1 = arith.constant 0 : i32
    %c0_i32_2 = arith.constant 0 : i32
    return %c0_i32, %c0_i32_0, %c0_i32_1 : i32, i32, i32
  }
  func.func @transform_6(%arg0: i32) -> (i32, i32) {
    %c0_i32 = arith.constant 0 : i32
    %c0_i32_0 = arith.constant 0 : i32
    %c0_i32_1 = arith.constant 0 : i32
    return %c0_i32, %c0_i32_0 : i32, i32
  }
  func.func @transform_7(%arg0: i32) -> (i32, i32) {
    %c0_i32 = arith.constant 0 : i32
    %c0_i32_0 = arith.constant 0 : i32
    %c0_i32_1 = arith.constant 0 : i32
    return %c0_i32, %c0_i32_0 : i32, i32
  }
  func.func @transform_8(%arg0: i32) -> (i32, i32) {
    %c0_i32 = arith.constant 0 : i32
    %c0_i32_0 = arith.constant 0 : i32
    %c0_i32_1 = arith.constant 0 : i32
    return %c0_i32, %c0_i32_0 : i32, i32
  }
  func.func @transform_9(%arg0: i32) -> (i32, i32) {
    %c0_i32 = arith.constant 0 : i32
    %c0_i32_0 = arith.constant 0 : i32
    return %arg0, %c0_i32 : i32, i32
  }
  func.func @transform_10(%arg0: i32) -> (i32, i32) {
    %c0_i32 = arith.constant 0 : i32
    %c0_i32_0 = arith.constant 0 : i32
    return %arg0, %c0_i32 : i32, i32
  }
}

</mosaic_0001>

<llo_original>
// kernel: tpu_custom_call.1
$region0: #{tpu_custom_call.1}
  #allocation0 [shape = 'u32[]', space=smem, size = 0x4, offset = 0x4, fixed_abs, tag = 'smem constant byte address 0x4 - core index']
  #allocation1 [shape = 'u32[144,128]{1,0:T(1,128)}', space=vmem, size = 0x12000, scoped, tag = 'internal scratch']
  #allocation2 [shape = 'f32[2,8]{1,0:T(2,128)}', space=vmem, size = 0x400, scoped, tag = 'scratch operand']
  %s0 = inlined_call_operand.vmem [shape: f32[2,32], index: 0, kind: input, shape index: {}]
  %s1 = inlined_call_operand.vmem [shape: f32[32,24], index: 1, kind: input, shape index: {}]
  %s2 = inlined_call_operand.vmem [shape: f32[1,24], index: 2, kind: input, shape index: {}]
  %s3 = inlined_call_operand.vmem [shape: f32[32,128], index: 3, kind: input, shape index: {}]
  %s4 = inlined_call_operand.vmem [shape: f32[2,8], index: 4, kind: input, shape index: {}]
  %s5 = inlined_call_operand.vmem [shape: f32[1,1,32], index: 5, kind: input, shape index: {}]
  %s6 = inlined_call_operand.vmem [shape: f32[2,2], index: 6, kind: input, shape index: {}]
  %s7 = inlined_call_operand.vmem [shape: f32[2,2], index: 7, kind: input, shape index: {}]
  %s8 = inlined_call_operand.vmem [shape: f32[2,32], index: 8, kind: input, shape index: {}]
  %s9 = inlined_call_operand.hbm [shape: f32[2,8], index: 9, kind: output, shape index: {0}]
  %s10 = inlined_call_operand.hbm [shape: f32[2,128], index: 10, kind: output, shape index: {1}]
  %11 = xla_tuple %s9, %s10
  %s12 = sld [smem:[#allocation0]]
  $region58: #{tpu_custom_call.1} parent=0
    _
  %s14 = ssub.s32 1, %s12
  %s15 = scalar_select 0, %s14, %s12
  $region1: #{tpu_custom_call.1} parent=0
    #allocation3 [shape = 'u8[1024]{0}', space=vmem, size = 0x400, scoped, tag = 'output window, operand 0, single buffered']
    #allocation4 [shape = 's32[1]{0}', space=sflag, size = 0x4, scoped, tag = 'scoped memory for tpu_custom_call.1']
    #allocation5 [shape = 'u8[1024]{0}', space=vmem, size = 0x400, scoped, tag = 'output window, operand 1, single buffered']
    #allocation6 [shape = 's32[1]{0}', space=sflag, size = 0x4, scoped, tag = 'scoped memory for tpu_custom_call.1']
    %16 = vsyncpa [#allocation4], 0
    %17 = vsyncpa [#allocation6], 0
    // Predicated region
    $region2: #{tpu_custom_call.1} parent=1 // pred_check
      _
    $region3: #{tpu_custom_call.1} parent=1 // pred_check_branch
      %19 = sbr.rel (0) target = $region5
    $region4: #{tpu_custom_call.1} parent=1 // pred_region
      _
    $region5: #{tpu_custom_call.1} parent=1 // pred_fallthru
      _
    // Predicated region
    $region6: #{tpu_custom_call.1} parent=1 // pred_check
      _
    $region7: #{tpu_custom_call.1} parent=1 // pred_check_branch
      %21 = sbr.rel (0) target = $region9
    $region8: #{tpu_custom_call.1} parent=1 // pred_region
      _
    $region9: #{tpu_custom_call.1} parent=1 // pred_fallthru
      _
    // Predicated region
    $region10: #{tpu_custom_call.1} parent=1 // pred_check
      _
    $region11: #{tpu_custom_call.1} parent=1 // pred_check_branch
      %23 = sbr.rel (0) target = $region13
    $region12: #{tpu_custom_call.1} parent=1 // pred_region
      _
    $region13: #{tpu_custom_call.1} parent=1 // pred_fallthru
      _
    // Predicated region
    $region14: #{tpu_custom_call.1} parent=1 // pred_check
      _
    $region15: #{tpu_custom_call.1} parent=1 // pred_check_branch
      %25 = sbr.rel (0) target = $region17
    $region16: #{tpu_custom_call.1} parent=1 // pred_region
      _
    $region17: #{tpu_custom_call.1} parent=1 // pred_fallthru
      _
    // Predicated region
    $region18: #{tpu_custom_call.1} parent=1 // pred_check
      _
    $region19: #{tpu_custom_call.1} parent=1 // pred_check_branch
      %27 = sbr.rel (0) target = $region21
    $region20: #{tpu_custom_call.1} parent=1 // pred_region
      _
    $region21: #{tpu_custom_call.1} parent=1 // pred_fallthru
      _
    // Predicated region
    $region22: #{tpu_custom_call.1} parent=1 // pred_check
      _
    $region23: #{tpu_custom_call.1} parent=1 // pred_check_branch
      %29 = sbr.rel (0) target = $region25
    $region24: #{tpu_custom_call.1} parent=1 // pred_region
      _
    $region25: #{tpu_custom_call.1} parent=1 // pred_fallthru
      _
    // Predicated region
    $region26: #{tpu_custom_call.1} parent=1 // pred_check
      _
    $region27: #{tpu_custom_call.1} parent=1 // pred_check_branch
      %31 = sbr.rel (0) target = $region29
    $region28: #{tpu_custom_call.1} parent=1 // pred_region
      _
    $region29: #{tpu_custom_call.1} parent=1 // pred_fallthru
      _
    // Predicated region
    $region30: #{tpu_custom_call.1} parent=1 // pred_check
      _
    $region31: #{tpu_custom_call.1} parent=1 // pred_check_branch
      %33 = sbr.rel (0) target = $region33
    $region32: #{tpu_custom_call.1} parent=1 // pred_region
      _
    $region33: #{tpu_custom_call.1} parent=1 // pred_fallthru
      _
    // Predicated region
    $region34: #{tpu_custom_call.1} parent=1 // pred_check
      _
    $region35: #{tpu_custom_call.1} parent=1 // pred_check_branch
      %35 = sbr.rel (0) target = $region37
    $region36: #{tpu_custom_call.1} parent=1 // pred_region
      _
    $region37: #{tpu_custom_call.1} parent=1 // pred_fallthru
      _
    %p36 = scmp.eq.s32.totalorder 0, 0
    // Predicated region
    $region38: #{tpu_custom_call.1} parent=1 // pred_check
      %p37 = pneg %p36
    $region39: #{tpu_custom_call.1} parent=1 // pred_check_branch
      %39 = sbr.rel (%p37) target = $region41
    $region40: #{tpu_custom_call.1} parent=1 // pred_region
      %v40 = vld [vmem:[%s4] sm:$0x3]
      %vm41 = vcmask 58368
      %42 = vst.msk [vmem:[#allocation2] sm:$0x3] %vm41, %v40
    $region41: #{tpu_custom_call.1} parent=1 // pred_fallthru
      _
    %v43 = vld [vmem:[%s0] sm:$0x3]
    %v44 = vld [vmem:[%s1] sm:$0xff]
    %v45 = vld [vmem:[%s1 + $0x8] sm:$0xff]
    %v46 = vld [vmem:[%s1 + $0x10] sm:$0xff]
    %v47 = vld [vmem:[%s1 + $0x18] sm:$0xff]
    %v48 = vld [vmem:[%s2] sm:$0x1]
    %v50 = vlaneseq
    %v51 = vshrl.u32 %v50, 7
    %v52 = vsub.s32 0, %v51
    %v53 = vrot.slane %v48, %v52
    %vm55 = vcmask 261120
    %v57 = vsel %vm55, %v43, 0
    %59 = vmatprep.subr.mxu0 0.0
    %60 = vmatpush1.msra.mxu0 %v44
    %61 = vmatprep.subr.mxu0 0.0
    %62 = vmatpush1.msra.mxu0 %v45
    %63 = vmatprep.subr.mxu0 0.0
    %64 = vmatpush1.msra.mxu0 %v46
    %65 = vmatprep.subr.mxu0 0.0
    %66 = vmatpush1.msra.mxu0 %v47
    %67 = vmatprep.subr.mxu0 0.0
    %68 = vmatpush1.msra.mxu0 0.0
    %69 = vmatprep.subr.mxu0 0.0
    %70 = vmatpush1.msra.mxu0 0.0
    %71 = vmatprep.subr.mxu0 0.0
    %72 = vmatpush1.msra.mxu0 0.0
    %73 = vmatprep.subr.mxu0 0.0
    %74 = vmatpush1.msra.mxu0 0.0
    %75 = vmatprep.subr.mxu0 0.0
    %76 = vmatpush1.msra.mxu0 0.0
    %77 = vmatprep.subr.mxu0 0.0
    %78 = vmatpush1.msra.mxu0 0.0
    %79 = vmatprep.subr.mxu0 0.0
    %80 = vmatpush1.msra.mxu0 0.0
    %81 = vmatprep.subr.mxu0 0.0
    %82 = vmatpush1.msra.mxu0 0.0
    %83 = vmatprep.subr.mxu0 0.0
    %84 = vmatpush1.msra.mxu0 0.0
    %85 = vmatprep.subr.mxu0 0.0
    %86 = vmatpush1.msra.mxu0 0.0
    %87 = vmatprep.subr.mxu0 0.0
    %88 = vmatpush1.msra.mxu0 0.0
    %89 = vmatprep.subr.mxu0 0.0
    %90 = vmatpush1.msra.mxu0 0.0
    %91 = vmatprep.subr.mxu0 0.0
    %92 = vmatpush1.msra.mxu0 0.0
    %93 = vmatprep.subr.mxu0 0.0
    %94 = vmatpush1.msra.mxu0 0.0
    %95 = vmatprep.subr.mxu0 0.0
    %96 = vmatpush1.msra.mxu0 0.0
    %97 = vmatprep.subr.mxu0 0.0
    %98 = vmatpush1.msra.mxu0 0.0
    %99 = vmatprep.subr.mxu0 0.0
    %100 = vmatpush1.msra.mxu0 0.0
    %101 = vmatprep.subr.mxu0 0.0
    %102 = vmatpush1.msra.mxu0 0.0
    %103 = vmatprep.subr.mxu0 0.0
    %104 = vmatpush1.msra.mxu0 0.0
    %105 = vmatprep.subr.mxu0 0.0
    %106 = vmatpush1.msra.mxu0 0.0
    %107 = vmatprep.subr.mxu0 0.0
    %108 = vmatpush1.msra.mxu0 0.0
    %109 = vmatprep.subr.mxu0 0.0
    %110 = vmatpush1.msra.mxu0 0.0
    %111 = vmatprep.subr.mxu0 0.0
    %112 = vmatpush1.msra.mxu0 0.0
    %113 = vmatprep.subr.mxu0 0.0
    %114 = vmatpush1.msra.mxu0 0.0
    %115 = vmatprep.subr.mxu0 0.0
    %116 = vmatpush1.msra.mxu0 0.0
    %117 = vmatprep.subr.mxu0 0.0
    %118 = vmatpush1.msra.mxu0 0.0
    %119 = vmatprep.subr.mxu0 0.0
    %120 = vmatpush1.msra.mxu0 0.0
    %121 = vmatprep.subr.mxu0 0.0
    %122 = vmatpush1.msra.mxu0 0.0
    %123 = vmatprep.mubr.f32.mxu0 0.0
    %124 = vmatmul.mubr.f32.gmra.mrb[0].mxu0 %v57
    %v125 = vpop.f32.mrb[0].mxu0
    %v126 = vadd.f32 %v53, %v125
    %v127 = vpop.f32.mrb[0].mxu0
    %128 = vdwg.mxu0
    %v129 = vmul.f32 %v126, 1.442695
    %v130 = vpow.pop %v129
    %v131 = vld [vmem:[%s6] sm:$0x3]
    %v132 = vld [vmem:[%s7] sm:$0x3]
    %v133 = vld [vmem:[#allocation2] sm:$0x3]
    %vm134 = vcmask 15360
    %v136 = vsel %vm134, %v132, 0
    %vm138 = vcmask 1041408
    %v140 = vsel %vm138, %v133, 0
    %142 = vmatprep.subr.mxu0 0.0
    %143 = vmatpush1.msra.mxu0 %v140
    %144 = vmatprep.subr.mxu0 0.0
    %145 = vmatpush1.msra.mxu0 0.0
    %146 = vmatprep.subr.mxu0 0.0
    %147 = vmatpush1.msra.mxu0 0.0
    %148 = vmatprep.subr.mxu0 0.0
    %149 = vmatpush1.msra.mxu0 0.0
    %150 = vmatprep.subr.mxu0 0.0
    %151 = vmatpush1.msra.mxu0 0.0
    %152 = vmatprep.subr.mxu0 0.0
    %153 = vmatpush1.msra.mxu0 0.0
    %154 = vmatprep.subr.mxu0 0.0
    %155 = vmatpush1.msra.mxu0 0.0
    %156 = vmatprep.subr.mxu0 0.0
    %157 = vmatpush1.msra.mxu0 0.0
    %158 = vmatprep.subr.mxu0 0.0
    %159 = vmatpush1.msra.mxu0 0.0
    %160 = vmatprep.subr.mxu0 0.0
    %161 = vmatpush1.msra.mxu0 0.0
    %162 = vmatprep.subr.mxu0 0.0
    %163 = vmatpush1.msra.mxu0 0.0
    %164 = vmatprep.subr.mxu0 0.0
    %165 = vmatpush1.msra.mxu0 0.0
    %166 = vmatprep.subr.mxu0 0.0
    %167 = vmatpush1.msra.mxu0 0.0
    %168 = vmatprep.subr.mxu0 0.0
    %169 = vmatpush1.msra.mxu0 0.0
    %170 = vmatprep.subr.mxu0 0.0
    %171 = vmatpush1.msra.mxu0 0.0
    %172 = vmatprep.subr.mxu0 0.0
    %173 = vmatpush1.msra.mxu0 0.0
    %174 = vmatprep.subr.mxu0 0.0
    %175 = vmatpush1.msra.mxu0 0.0
    %176 = vmatprep.subr.mxu0 0.0
    %177 = vmatpush1.msra.mxu0 0.0
    %178 = vmatprep.subr.mxu0 0.0
    %179 = vmatpush1.msra.mxu0 0.0
    %180 = vmatprep.subr.mxu0 0.0
    %181 = vmatpush1.msra.mxu0 0.0
    %182 = vmatprep.subr.mxu0 0.0
    %183 = vmatpush1.msra.mxu0 0.0
    %184 = vmatprep.subr.mxu0 0.0
    %185 = vmatpush1.msra.mxu0 0.0
    %186 = vmatprep.subr.mxu0 0.0
    %187 = vmatpush1.msra.mxu0 0.0
    %188 = vmatprep.subr.mxu0 0.0
    %189 = vmatpush1.msra.mxu0 0.0
    %190 = vmatprep.subr.mxu0 0.0
    %191 = vmatpush1.msra.mxu0 0.0
    %192 = vmatprep.subr.mxu0 0.0
    %193 = vmatpush1.msra.mxu0 0.0
    %194 = vmatprep.subr.mxu0 0.0
    %195 = vmatpush1.msra.mxu0 0.0
    %196 = vmatprep.subr.mxu0 0.0
    %197 = vmatpush1.msra.mxu0 0.0
    %198 = vmatprep.subr.mxu0 0.0
    %199 = vmatpush1.msra.mxu0 0.0
    %200 = vmatprep.subr.mxu0 0.0
    %201 = vmatpush1.msra.mxu0 0.0
    %202 = vmatprep.subr.mxu0 0.0
    %203 = vmatpush1.msra.mxu0 0.0
    %204 = vmatprep.subr.mxu0 0.0
    %205 = vmatpush1.msra.mxu0 0.0
    %206 = vmatprep.mubr.f32.mxu0 0.0
    %207 = vmatmul.mubr.f32.gmra.mrb[0].mxu0 %v136
    %v208 = vpop.f32.mrb[0].mxu0
    %v209 = vadd.f32 0.0, %v208
    %v210 = vpop.f32.mrb[0].mxu0
    %211 = vdwg.mxu0
    %213 = vrot.lane.b32.xlu0 %v130, 112
    %v214 = vpop.permute.xlu0 %213
    %v216 = vsel %vm134, %v131, 0
    %v218 = vsel %vm138, %v214, 0
    %220 = vmatprep.subr.mxu0 0.0
    %221 = vmatpush1.msra.mxu0 %v218
    %222 = vmatprep.subr.mxu0 0.0
    %223 = vmatpush1.msra.mxu0 0.0
    %224 = vmatprep.subr.mxu0 0.0
    %225 = vmatpush1.msra.mxu0 0.0
    %226 = vmatprep.subr.mxu0 0.0
    %227 = vmatpush1.msra.mxu0 0.0
    %228 = vmatprep.subr.mxu0 0.0
    %229 = vmatpush1.msra.mxu0 0.0
    %230 = vmatprep.subr.mxu0 0.0
    %231 = vmatpush1.msra.mxu0 0.0
    %232 = vmatprep.subr.mxu0 0.0
    %233 = vmatpush1.msra.mxu0 0.0
    %234 = vmatprep.subr.mxu0 0.0
    %235 = vmatpush1.msra.mxu0 0.0
    %236 = vmatprep.subr.mxu0 0.0
    %237 = vmatpush1.msra.mxu0 0.0
    %238 = vmatprep.subr.mxu0 0.0
    %239 = vmatpush1.msra.mxu0 0.0
    %240 = vmatprep.subr.mxu0 0.0
    %241 = vmatpush1.msra.mxu0 0.0
    %242 = vmatprep.subr.mxu0 0.0
    %243 = vmatpush1.msra.mxu0 0.0
    %244 = vmatprep.subr.mxu0 0.0
    %245 = vmatpush1.msra.mxu0 0.0
    %246 = vmatprep.subr.mxu0 0.0
    %247 = vmatpush1.msra.mxu0 0.0
    %248 = vmatprep.subr.mxu0 0.0
    %249 = vmatpush1.msra.mxu0 0.0
    %250 = vmatprep.subr.mxu0 0.0
    %251 = vmatpush1.msra.mxu0 0.0
    %252 = vmatprep.subr.mxu0 0.0
    %253 = vmatpush1.msra.mxu0 0.0
    %254 = vmatprep.subr.mxu0 0.0
    %255 = vmatpush1.msra.mxu0 0.0
    %256 = vmatprep.subr.mxu0 0.0
    %257 = vmatpush1.msra.mxu0 0.0
    %258 = vmatprep.subr.mxu0 0.0
    %259 = vmatpush1.msra.mxu0 0.0
    %260 = vmatprep.subr.mxu0 0.0
    %261 = vmatpush1.msra.mxu0 0.0
    %262 = vmatprep.subr.mxu0 0.0
    %263 = vmatpush1.msra.mxu0 0.0
    %264 = vmatprep.subr.mxu0 0.0
    %265 = vmatpush1.msra.mxu0 0.0
    %266 = vmatprep.subr.mxu0 0.0
    %267 = vmatpush1.msra.mxu0 0.0
    %268 = vmatprep.subr.mxu0 0.0
    %269 = vmatpush1.msra.mxu0 0.0
    %270 = vmatprep.subr.mxu0 0.0
    %271 = vmatpush1.msra.mxu0 0.0
    %272 = vmatprep.subr.mxu0 0.0
    %273 = vmatpush1.msra.mxu0 0.0
    %274 = vmatprep.subr.mxu0 0.0
    %275 = vmatpush1.msra.mxu0 0.0
    %276 = vmatprep.subr.mxu0 0.0
    %277 = vmatpush1.msra.mxu0 0.0
    %278 = vmatprep.subr.mxu0 0.0
    %279 = vmatpush1.msra.mxu0 0.0
    %280 = vmatprep.subr.mxu0 0.0
    %281 = vmatpush1.msra.mxu0 0.0
    %282 = vmatprep.subr.mxu0 0.0
    %283 = vmatpush1.msra.mxu0 0.0
    %284 = vmatprep.mubr.f32.mxu0 0.0
    %285 = vmatmul.mubr.f32.gmra.mrb[0].mxu0 %v216
    %v286 = vpop.f32.mrb[0].mxu0
    %v287 = vadd.f32 %v209, %v286
    %v288 = vpop.f32.mrb[0].mxu0
    %289 = vdwg.mxu0
    %vm290 = vcmask 58368
    %291 = vst.msk [vmem:[#allocation2] sm:$0x3] %vm290, %v287
    %292 = vst.msk [vmem:[#allocation3] sm:$0x3] %vm290, %v287
    %v293 = vlaneseq
    %v294 = vshrl.u32 %v293, 7
    %v295 = vsub.s32 0, %v294
    %v296 = vrot.slane %v287, %v295
    %298 = vbcast.lane.b32.xlu0 %v296, 256
    %v299 = vpop.permute.xlu0 %298
    %v300 = vlaneseq
    %v301 = vshrl.u32 %v300, 7
    %v302 = vsub.s32 1, %v301
    %v303 = vrot.slane %v287, %v302
    %305 = vbcast.lane.b32.xlu0 %v303, 256
    %v306 = vpop.permute.xlu0 %305
    %v307 = vld [vmem:[%s5] sm:$0x1]
    %v309 = vlaneseq
    %v310 = vshrl.u32 %v309, 7
    %v311 = vsub.s32 0, %v310
    %v312 = vrot.slane %v307, %v311
    %v314 = vsub.f32 %v299, %v312
    %v315 = vsub.f32 %v306, %v312
    %v316 = vlaneseq
    %v317 = vshrl.u32 %v316, 7
    %v318 = vsub.s32 0, %v317
    %v319 = vrot.slane %v126, %v318
    %321 = vbcast.lane.b32.xlu0 %v319, 256
    %v322 = vpop.permute.xlu0 %321
    %v323 = vlaneseq
    %v324 = vshrl.u32 %v323, 7
    %v325 = vsub.s32 1, %v324
    %v326 = vrot.slane %v126, %v325
    %328 = vbcast.lane.b32.xlu0 %v326, 256
    %v329 = vpop.permute.xlu0 %328
    %v330 = vlaneseq
    %v331 = vshrl.u32 %v330, 7
    %v332 = vsub.s32 0, %v331
    %v333 = vrot.slane %v130, %v332
    %s335 = sor.u32 256, 8
    %336 = vbcast.lane.b32.xlu0 %v333, %s335
    %v337 = vpop.permute.xlu0 %336
    %v338 = vlaneseq
    %v339 = vshrl.u32 %v338, 7
    %v340 = vsub.s32 1, %v339
    %v341 = vrot.slane %v130, %v340
    %s343 = sor.u32 256, 8
    %344 = vbcast.lane.b32.xlu0 %v341, %s343
    %v345 = vpop.permute.xlu0 %344
    %v346 = vmul.f32 %v314, %v314
    %v347 = vmul.f32 %v315, %v315
    %v348 = vmul.f32 %v337, %v346
    %v349 = vmul.f32 %v345, %v347
    %v350 = vsub.f32 %v322, %v348
    %v351 = vsub.f32 %v329, %v349
    %v352 = vmul.f32 %v350, 1.442695
    %v353 = vpow.pop %v352
    %v354 = vmul.f32 %v351, 1.442695
    %v355 = vpow.pop %v354
    %v356 = vsel %vm55, %v353, 0.0
    %v357 = vrot.slane %v356, 4
    %v358 = vadd.f32 %v356, %v357
    %v359 = vrot.slane %v358, 2
    %v360 = vadd.f32 %v358, %v359
    %v361 = vrot.slane %v360, 1
    %v362 = vadd.f32 %v360, %v361
    %v363 = vsel %vm55, %v355, 0.0
    %v364 = vrot.slane %v363, 4
    %v365 = vadd.f32 %v363, %v364
    %v366 = vrot.slane %v365, 2
    %v367 = vadd.f32 %v365, %v366
    %v368 = vrot.slane %v367, 1
    %v369 = vadd.f32 %v367, %v368
    %v370 = vld [vmem:[%s8] sm:$0x3]
    %v372 = vrot.slane %v370, 1
    %v375 = vmul.f32 %v362, %v370
    %v376 = vmul.f32 %v369, %v372
    %v377 = vld [vmem:[%s3] sm:$0xff]
    %v378 = vld [vmem:[%s3 + $0x8] sm:$0xff]
    %v379 = vld [vmem:[%s3 + $0x10] sm:$0xff]
    %v380 = vld [vmem:[%s3 + $0x18] sm:$0xff]
    %v383 = vrot.slane %v376, 7
    %vm384 = vcmask 1041409
    %v385 = vsel %vm384, %v383, %v375
    %v386 = vsel %vm55, %v385, 0
    %388 = vmatprep.subr.mxu0 0.0
    %389 = vmatpush1.msra.mxu0 %v377
    %390 = vmatprep.subr.mxu0 0.0
    %391 = vmatpush1.msra.mxu0 %v378
    %392 = vmatprep.subr.mxu0 0.0
    %393 = vmatpush1.msra.mxu0 %v379
    %394 = vmatprep.subr.mxu0 0.0
    %395 = vmatpush1.msra.mxu0 %v380
    %396 = vmatprep.subr.mxu0 0.0
    %397 = vmatpush1.msra.mxu0 0.0
    %398 = vmatprep.subr.mxu0 0.0
    %399 = vmatpush1.msra.mxu0 0.0
    %400 = vmatprep.subr.mxu0 0.0
    %401 = vmatpush1.msra.mxu0 0.0
    %402 = vmatprep.subr.mxu0 0.0
    %403 = vmatpush1.msra.mxu0 0.0
    %404 = vmatprep.subr.mxu0 0.0
    %405 = vmatpush1.msra.mxu0 0.0
    %406 = vmatprep.subr.mxu0 0.0
    %407 = vmatpush1.msra.mxu0 0.0
    %408 = vmatprep.subr.mxu0 0.0
    %409 = vmatpush1.msra.mxu0 0.0
    %410 = vmatprep.subr.mxu0 0.0
    %411 = vmatpush1.msra.mxu0 0.0
    %412 = vmatprep.subr.mxu0 0.0
    %413 = vmatpush1.msra.mxu0 0.0
    %414 = vmatprep.subr.mxu0 0.0
    %415 = vmatpush1.msra.mxu0 0.0
    %416 = vmatprep.subr.mxu0 0.0
    %417 = vmatpush1.msra.mxu0 0.0
    %418 = vmatprep.subr.mxu0 0.0
    %419 = vmatpush1.msra.mxu0 0.0
    %420 = vmatprep.subr.mxu0 0.0
    %421 = vmatpush1.msra.mxu0 0.0
    %422 = vmatprep.subr.mxu0 0.0
    %423 = vmatpush1.msra.mxu0 0.0
    %424 = vmatprep.subr.mxu0 0.0
    %425 = vmatpush1.msra.mxu0 0.0
    %426 = vmatprep.subr.mxu0 0.0
    %427 = vmatpush1.msra.mxu0 0.0
    %428 = vmatprep.subr.mxu0 0.0
    %429 = vmatpush1.msra.mxu0 0.0
    %430 = vmatprep.subr.mxu0 0.0
    %431 = vmatpush1.msra.mxu0 0.0
    %432 = vmatprep.subr.mxu0 0.0
    %433 = vmatpush1.msra.mxu0 0.0
    %434 = vmatprep.subr.mxu0 0.0
    %435 = vmatpush1.msra.mxu0 0.0
    %436 = vmatprep.subr.mxu0 0.0
    %437 = vmatpush1.msra.mxu0 0.0
    %438 = vmatprep.subr.mxu0 0.0
    %439 = vmatpush1.msra.mxu0 0.0
    %440 = vmatprep.subr.mxu0 0.0
    %441 = vmatpush1.msra.mxu0 0.0
    %442 = vmatprep.subr.mxu0 0.0
    %443 = vmatpush1.msra.mxu0 0.0
    %444 = vmatprep.subr.mxu0 0.0
    %445 = vmatpush1.msra.mxu0 0.0
    %446 = vmatprep.subr.mxu0 0.0
    %447 = vmatpush1.msra.mxu0 0.0
    %448 = vmatprep.subr.mxu0 0.0
    %449 = vmatpush1.msra.mxu0 0.0
    %450 = vmatprep.subr.mxu0 0.0
    %451 = vmatpush1.msra.mxu0 0.0
    %452 = vmatprep.mubr.f32.mxu0 0.0
    %453 = vmatmul.mubr.f32.gmra.mrb[0].mxu0 %v386
    %v454 = vpop.f32.mrb[0].mxu0
    %v455 = vadd.f32 0.0, %v454
    %v456 = vpop.f32.mrb[0].mxu0
    %457 = vdwg.mxu0
    %458 = vst [vmem:[#allocation5] sm:$0x3] %v455
    // Predicated region
    $region42: #{tpu_custom_call.1} parent=1 // pred_check
      _
    $region43: #{tpu_custom_call.1} parent=1 // pred_check_branch
      %460 = sbr.rel (0) target = $region45
    $region44: #{tpu_custom_call.1} parent=1 // pred_region
      %s462 = ssub.s32 32, 32
      %463 = vsyncadd [#allocation4], %s462
      %s465 = sshll.u32 [#allocation3], 4
      %s466 = int_to_ptr.vmem [resolvable:$true] %s465
      %468 = dma.vmem_to_hbm [thread:$0]  %s466, 32, %s9, [#allocation4]
    $region45: #{tpu_custom_call.1} parent=1 // pred_fallthru
      _
    // Predicated region
    $region46: #{tpu_custom_call.1} parent=1 // pred_check
      _
    $region47: #{tpu_custom_call.1} parent=1 // pred_check_branch
      %470 = sbr.rel (0) target = $region49
    $region48: #{tpu_custom_call.1} parent=1 // pred_region
      %s472 = ssub.s32 32, 32
      %473 = vsyncadd [#allocation6], %s472
      %s475 = sshll.u32 [#allocation5], 4
      %s476 = int_to_ptr.vmem [resolvable:$true] %s475
      %478 = dma.vmem_to_hbm [thread:$0]  %s476, 32, %s10, [#allocation6]
    $region49: #{tpu_custom_call.1} parent=1 // pred_fallthru
      _
    // Predicated region
    $region50: #{tpu_custom_call.1} parent=1 // pred_check
      _
    $region51: #{tpu_custom_call.1} parent=1 // pred_check_branch
      %480 = sbr.rel (0) target = $region53
    $region52: #{tpu_custom_call.1} parent=1 // pred_region
      %481 = dma.done [#allocation4], 32
    $region53: #{tpu_custom_call.1} parent=1 // pred_fallthru
      _
    // Predicated region
    $region54: #{tpu_custom_call.1} parent=1 // pred_check
      _
    $region55: #{tpu_custom_call.1} parent=1 // pred_check_branch
      %483 = sbr.rel (0) target = $region57
    $region56: #{tpu_custom_call.1} parent=1 // pred_region
      %484 = dma.done [#allocation6], 32
    $region57: #{tpu_custom_call.1} parent=1 // pred_fallthru
      _
    %485 = vsyncpa [#allocation4], 1
    %486 = vsyncpa [#allocation6], 1

</llo_original>
